<compile_context>
chip_gen: v5e
topology: v5e:2x2
jax: 0.10.0
libtpu: 0.0.40
codegen_flags: <defaults>
</compile_context>

<pallas_src>
import jax
import jax.numpy as jnp
from jax import lax
from jax.experimental import pallas as pl
from jax.experimental.pallas import tpu as pltpu


# --------------------------------------------------------------------------- #
# Kernel
# --------------------------------------------------------------------------- #
def _make_mlp_kernel(layer_meta):
    """layer_meta: tuple of static (row_off, d_in, d_out, bias_row) per layer.

    Refs:
      x_ref    [tile_b, d_in]   f32   (batch tile, native layout)
      slab_ref [R, C]           f32   (all W_i^T and biases packed)
      o_ref    [tile_b, d_out]  f32
    """

    def kernel(x_ref, slab_ref, o_ref):
        slab = slab_ref[...]              # tiny (tens of KB): load once per step
        h = x_ref[...]                    # [tile_b, d_in0] f32
        for li, (r, d_in, d_out, br) in enumerate(layer_meta):
            if li > 0:                    # tanh between Linear layers only
                h = jnp.tanh(h)
            wT = lax.slice(slab, (r, 0), (r + d_in, d_out))    # [d_in, d_out]
            b = lax.slice(slab, (br, 0), (br + 1, d_out))      # [1, d_out] row
            # Plain matmul on the MXU, f32 accumulation; bias broadcast over
            # sublanes (batch rows).
            h = jnp.dot(h, wT, preferred_element_type=jnp.float32) + b
        o_ref[...] = h.astype(o_ref.dtype)

    return kernel


# --------------------------------------------------------------------------- #
# One-time parameter packing (cached by the caller; NOT in the hot path)
# --------------------------------------------------------------------------- #
def prepare_params(params):
    """Pack PyTorch-layout params [(w [d_out, d_in], b [d_out]), ...] into a
    single f32 slab.

    Layout per layer (row offsets 8-aligned):
      slab[r : r + d_in, 0 : d_out]       = w.T   (pre-transposed -> plain h @ wT)
      slab[r + roundup8(d_in), 0 : d_out] = b     (bias as a row)
    Returns (slab, layer_meta) with layer_meta = ((r, d_in, d_out, bias_row), ...).
    """
    def r8(n):
        return -(-n // 8) * 8

    def r128(n):
        return -(-n // 128) * 128

    max_d_out = max(int(w.shape[0]) for (w, _) in params)
    cols = max(128, r128(max_d_out))

    meta = []
    rows = 0
    for (w, _) in params:
        d_out, d_in = int(w.shape[0]), int(w.shape[1])
        r = rows
        bias_row = r + r8(d_in)
        meta.append((r, d_in, d_out, bias_row))
        rows = bias_row + 8               # keep every layer block 8-row aligned

    slab = jnp.zeros((rows, cols), jnp.float32)
    for (r, d_in, d_out, bias_row), (w, b) in zip(meta, params):
        slab = slab.at[r:r + d_in, 0:d_out].set(jnp.asarray(w, jnp.float32).T)
        slab = slab.at[bias_row, 0:d_out].set(jnp.asarray(b, jnp.float32))
    return slab, tuple(meta)


# --------------------------------------------------------------------------- #
# Tile selection (generation-aware)
# --------------------------------------------------------------------------- #
def _num_tensorcores():
    """v7x has 2 TensorCores per chip; v5e/v6e have 1."""
    try:
        dev = jax.devices()[0]
        n = getattr(dev, "num_cores", None)
        if isinstance(n, int) and n > 0:
            return n
        kind = str(getattr(dev, "device_kind", "")).lower()
        if "v7" in kind:
            return 2
    except Exception:
        pass
    return 1


def _pick_batch_tile(B, n_cores=1):
    """Largest lane-dense (multiple-of-128) divisor of B, up to 8192, that
    still leaves >= n_cores grid steps.  On single-TC chips this means one big
    step; on v7x it keeps both cores fed.  Falls back to a single full-extent
    block when B has no multiple-of-128 divisor."""
    cap = min(B, 8192)
    best = None
    for t in range(128, cap + 1, 128):
        if B % t == 0 and (B // t) >= n_cores:
            best = t
    if best is None:
        for t in range(128, cap + 1, 128):
            if B % t == 0:
                best = t
    return best if best is not None else B


# --------------------------------------------------------------------------- #
# Forward wrapper (hot path: a single pallas_call dispatch)
# --------------------------------------------------------------------------- #
def value_nn_forward(x, prepared, *, tile_b=None):
    """x: [B, d_in] f32; prepared: output of prepare_params.  Returns [B, d_out] f32."""
    slab, layer_meta = prepared
    B, d_in = x.shape
    assert d_in == layer_meta[0][1], "input feature dim mismatch"
    d_out = layer_meta[-1][2]

    if tile_b is None:
        tile_b = _pick_batch_tile(B, _num_tensorcores())
    assert B % tile_b == 0, "batch must be a multiple of the batch tile"

    kernel = _make_mlp_kernel(layer_meta)

    return pl.pallas_call(
        kernel,
        out_shape=jax.ShapeDtypeStruct((B, d_out), jnp.float32),
        grid_spec=pltpu.PrefetchScalarGridSpec(
            num_scalar_prefetch=0,
            grid=(B // tile_b,),
            in_specs=[
                pl.BlockSpec((tile_b, d_in), lambda i: (i, 0)),
                # Single packed parameter slab, same block every grid step
                # (fetched once, stays VMEM-resident across the grid loop).
                pl.BlockSpec(slab.shape, lambda i: (0, 0)),
            ],
            out_specs=pl.BlockSpec((tile_b, d_out), lambda i: (i, 0)),
        ),
        compiler_params=pltpu.CompilerParams(
            # TODO(synk): on v7x, verify in a trace that the batch axis really
            # shards across both TensorCores; if not, switch this axis to
            # pltpu.CORE_PARALLEL (or an explicit core_map).
            dimension_semantics=("parallel",),
        ),
    )(x, slab)


# --------------------------------------------------------------------------- #
# Reference / init (PyTorch semantics)
# --------------------------------------------------------------------------- #
def init_value_nn_params(key, input_dim, output_dim, layers):
    """nn.Linear default init: U(-1/sqrt(fan_in), +1/sqrt(fan_in)).
    Weights in PyTorch layout [fan_out, fan_in], biases [fan_out]."""
    dims = [input_dim[0]] + list(layers) + [output_dim]
    params = []
    for i in range(len(dims) - 1):
        fan_in, fan_out = dims[i], dims[i + 1]
        key, kw, kb = jax.random.split(key, 3)
        bound = 1.0 / (float(fan_in) ** 0.5)
        w = jax.random.uniform(kw, (fan_out, fan_in), jnp.float32, -bound, bound)
        b = jax.random.uniform(kb, (fan_out,), jnp.float32, -bound, bound)
        params.append((w, b))
    return params


def value_nn_reference(x, params):
    w, b = params[0]
    h = x @ w.T + b
    for (w, b) in params[1:]:
        h = jnp.tanh(h)
        h = h @ w.T + b
    return h


# --------------------------------------------------------------------------- #
# Demo
# --------------------------------------------------------------------------- #
if __name__ == "__main__":
    # ValueNN(input_dim=(16,), output_dim=4, layers=[32, 32])
    input_dim = (16,)
    output_dim = 4
    hidden_layers = [32, 32]
    batch = 512  # lane-dense; 1 big step on v5e/v6e, 2x256 on v7x

    key = jax.random.PRNGKey(0)
    key, kx = jax.random.split(key)
    x = jax.random.normal(kx, (batch, input_dim[0]), jnp.float32)

    params = init_value_nn_params(key, input_dim, output_dim, hidden_layers)
    ref = value_nn_reference(x, params)

    # One-time packing (cached); the per-call hot path is a single pallas_call.
    prepared = prepare_params(params)
    fwd = jax.jit(lambda xx: value_nn_forward(xx, prepared))

    out = jax.block_until_ready(fwd(x))
    assert out.shape == (batch, output_dim)
    assert jnp.allclose(out, ref, atol=1e-5, rtol=1e-5), "mismatch vs reference"

    print("KERNEL_OK")
</pallas_src>

<mosaic_0001>
module attributes {stable_mosaic.version = 11 : i64} {
  func.func @kernel(%arg0: i32, %arg1: memref<512x16xf32, #tpu.memory_space<vmem>>, %arg2: memref<104x128xf32, #tpu.memory_space<vmem>>, %arg3: memref<512x4xf32, #tpu.memory_space<vmem>>) attributes {dimension_semantics = [#tpu.dimension_semantics<parallel>], iteration_bounds = array<i64: 1>, scalar_prefetch = 0 : i64, scratch_operands = 0 : i64, tpu.core_type = #tpu.core_type<tc>, window_params = [{transform_indices = @transform_0, window_bounds = array<i64: 512, 16>}, {pipeline_mode = #tpu.pipeline_mode<synchronous>, transform_indices = @transform_1, window_bounds = array<i64: 104, 128>}, {transform_indices = @transform_2, window_bounds = array<i64: 512, 4>}]} {
    %c0 = arith.constant 0 : index
    %c0_0 = arith.constant 0 : index
    %0 = vector.load %arg2[%c0, %c0_0] : memref<104x128xf32, #tpu.memory_space<vmem>>, vector<104x128xf32>
    %c0_1 = arith.constant 0 : index
    %c0_2 = arith.constant 0 : index
    %1 = vector.load %arg1[%c0_1, %c0_2] : memref<512x16xf32, #tpu.memory_space<vmem>>, vector<512x16xf32>
    %2 = vector.extract_strided_slice %0 {offsets = [0, 0], sizes = [16, 32], strides = [1, 1]} : vector<104x128xf32> to vector<16x32xf32>
    %3 = vector.extract_strided_slice %0 {offsets = [16, 0], sizes = [1, 32], strides = [1, 1]} : vector<104x128xf32> to vector<1x32xf32>
    %cst = arith.constant dense<0.000000e+00> : vector<512x32xf32>
    %4 = tpu.matmul %1, %2, %cst {dimension_numbers = #tpu.dot_dimension_numbers<[1], [0], [0], [1], [0, 0, 1, 1], [], []>} : vector<512x16xf32>, vector<16x32xf32>, vector<512x32xf32> -> vector<512x32xf32>
    %5 = vector.broadcast %3 : vector<1x32xf32> to vector<512x32xf32>
    %6 = arith.addf %4, %5 : vector<512x32xf32>
    %7 = math.tanh %6 : vector<512x32xf32>
    %8 = vector.extract_strided_slice %0 {offsets = [24, 0], sizes = [32, 32], strides = [1, 1]} : vector<104x128xf32> to vector<32x32xf32>
    %9 = vector.extract_strided_slice %0 {offsets = [56, 0], sizes = [1, 32], strides = [1, 1]} : vector<104x128xf32> to vector<1x32xf32>
    %cst_3 = arith.constant dense<0.000000e+00> : vector<512x32xf32>
    %10 = tpu.matmul %7, %8, %cst_3 {dimension_numbers = #tpu.dot_dimension_numbers<[1], [0], [0], [1], [0, 0, 1, 1], [], []>} : vector<512x32xf32>, vector<32x32xf32>, vector<512x32xf32> -> vector<512x32xf32>
    %11 = vector.broadcast %9 : vector<1x32xf32> to vector<512x32xf32>
    %12 = arith.addf %10, %11 : vector<512x32xf32>
    %13 = math.tanh %12 : vector<512x32xf32>
    %14 = vector.extract_strided_slice %0 {offsets = [64, 0], sizes = [32, 4], strides = [1, 1]} : vector<104x128xf32> to vector<32x4xf32>
    %15 = vector.extract_strided_slice %0 {offsets = [96, 0], sizes = [1, 4], strides = [1, 1]} : vector<104x128xf32> to vector<1x4xf32>
    %cst_4 = arith.constant dense<0.000000e+00> : vector<512x4xf32>
    %16 = tpu.matmul %13, %14, %cst_4 {dimension_numbers = #tpu.dot_dimension_numbers<[1], [0], [0], [1], [0, 0, 1, 1], [], []>} : vector<512x32xf32>, vector<32x4xf32>, vector<512x4xf32> -> vector<512x4xf32>
    %17 = vector.broadcast %15 : vector<1x4xf32> to vector<512x4xf32>
    %18 = arith.addf %16, %17 : vector<512x4xf32>
    %c0_5 = arith.constant 0 : index
    %c0_6 = arith.constant 0 : index
    %19 = vector.load %arg3[%c0_5, %c0_6] : memref<512x4xf32, #tpu.memory_space<vmem>>, vector<512x4xf32>
    tpu.vector_store %arg3[%c0_5, %c0_6], %18 {strides = array<i32>} : memref<512x4xf32, #tpu.memory_space<vmem>>, vector<512x4xf32>,
    return
  }
  func.func @transform_0(%arg0: i32) -> (i32, i32) {
    %c0_i32 = arith.constant 0 : i32
    %c0_i32_0 = arith.constant 0 : i32
    return %arg0, %c0_i32 : i32, i32
  }
  func.func @transform_1(%arg0: i32) -> (i32, i32) {
    %c0_i32 = arith.constant 0 : i32
    %c0_i32_0 = arith.constant 0 : i32
    %c0_i32_1 = arith.constant 0 : i32
    return %c0_i32, %c0_i32_0 : i32, i32
  }
  func.func @transform_2(%arg0: i32) -> (i32, i32) {
    %c0_i32 = arith.constant 0 : i32
    %c0_i32_0 = arith.constant 0 : i32
    return %arg0, %c0_i32 : i32, i32
  }
}

</mosaic_0001>

<llo_original>
// kernel: _lambda_.1
$region0: #{_lambda_.1}
  #allocation0 [shape = 'u32[]', space=smem, size = 0x4, offset = 0x4, fixed_abs, tag = 'smem constant byte address 0x4 - core index']
  #allocation1 [shape = 'u32[72,128]{1,0:T(1,128)}', space=vmem, size = 0x9000, scoped, tag = 'internal scratch']
  %s0 = inlined_call_operand.vmem [shape: f32[512,16], index: 0, kind: input, shape index: {}]
  %s1 = inlined_call_operand.vmem [shape: f32[104,128], index: 1, kind: input, shape index: {}]
  %s2 = inlined_call_operand.vmem [shape: f32[512,4], index: 2, kind: output, shape index: {}]
  %s3 = sld [smem:[#allocation0]]
  $region18: #{_lambda_.1} parent=0
    _
  %s5 = ssub.s32 1, %s3
  %s6 = scalar_select 0, %s5, %s3
  // Predicated region
  $region2: #{_lambda_.1} parent=0 // pred_check
    _
  $region3: #{_lambda_.1} parent=0 // pred_check_branch
    %8 = sbr.rel (0) target = $region5
  $region4: #{_lambda_.1} parent=0 // pred_region
    _
  $region5: #{_lambda_.1} parent=0 // pred_fallthru
    _
  // Predicated region
  $region6: #{_lambda_.1} parent=0 // pred_check
    _
  $region7: #{_lambda_.1} parent=0 // pred_check_branch
    %10 = sbr.rel (0) target = $region9
  $region8: #{_lambda_.1} parent=0 // pred_region
    _
  $region9: #{_lambda_.1} parent=0 // pred_fallthru
    _
  %v11 = vld [vmem:[%s1] sm:$0xff]
  %v12 = vld [vmem:[%s1 + $0x8] sm:$0xff]
  %v13 = vld [vmem:[%s1 + $0x10] sm:$0xff]
  %v14 = vld [vmem:[%s1 + $0x18] sm:$0xff]
  %v15 = vld [vmem:[%s1 + $0x20] sm:$0xff]
  %v16 = vld [vmem:[%s1 + $0x28] sm:$0xff]
  %v17 = vld [vmem:[%s1 + $0x30] sm:$0xff]
  %v18 = vld [vmem:[%s1 + $0x38] sm:$0xff]
  %v19 = vld [vmem:[%s1 + $0x40] sm:$0xff]
  %v20 = vld [vmem:[%s1 + $0x48] sm:$0xff]
  %v21 = vld [vmem:[%s1 + $0x50] sm:$0xff]
  %v22 = vld [vmem:[%s1 + $0x58] sm:$0xff]
  %v23 = vld [vmem:[%s1 + $0x60] sm:$0xff]
  %v24 = vld [vmem:[%s0] sm:$0xff]
  %v25 = vld [vmem:[%s0 + $0x8] sm:$0xff]
  %v26 = vld [vmem:[%s0 + $0x10] sm:$0xff]
  %v27 = vld [vmem:[%s0 + $0x18] sm:$0xff]
  %v28 = vld [vmem:[%s0 + $0x20] sm:$0xff]
  %v29 = vld [vmem:[%s0 + $0x28] sm:$0xff]
  %v30 = vld [vmem:[%s0 + $0x30] sm:$0xff]
  %v31 = vld [vmem:[%s0 + $0x38] sm:$0xff]
  %v32 = vld [vmem:[%s0 + $0x40] sm:$0xff]
  %v33 = vld [vmem:[%s0 + $0x48] sm:$0xff]
  %v34 = vld [vmem:[%s0 + $0x50] sm:$0xff]
  %v35 = vld [vmem:[%s0 + $0x58] sm:$0xff]
  %v36 = vld [vmem:[%s0 + $0x60] sm:$0xff]
  %v37 = vld [vmem:[%s0 + $0x68] sm:$0xff]
  %v38 = vld [vmem:[%s0 + $0x70] sm:$0xff]
  %v39 = vld [vmem:[%s0 + $0x78] sm:$0xff]
  %v40 = vld [vmem:[%s0 + $0x80] sm:$0xff]
  %v41 = vld [vmem:[%s0 + $0x88] sm:$0xff]
  %v42 = vld [vmem:[%s0 + $0x90] sm:$0xff]
  %v43 = vld [vmem:[%s0 + $0x98] sm:$0xff]
  %v44 = vld [vmem:[%s0 + $0xa0] sm:$0xff]
  %v45 = vld [vmem:[%s0 + $0xa8] sm:$0xff]
  %v46 = vld [vmem:[%s0 + $0xb0] sm:$0xff]
  %v47 = vld [vmem:[%s0 + $0xb8] sm:$0xff]
  %v48 = vld [vmem:[%s0 + $0xc0] sm:$0xff]
  %v49 = vld [vmem:[%s0 + $0xc8] sm:$0xff]
  %v50 = vld [vmem:[%s0 + $0xd0] sm:$0xff]
  %v51 = vld [vmem:[%s0 + $0xd8] sm:$0xff]
  %v52 = vld [vmem:[%s0 + $0xe0] sm:$0xff]
  %v53 = vld [vmem:[%s0 + $0xe8] sm:$0xff]
  %v54 = vld [vmem:[%s0 + $0xf0] sm:$0xff]
  %v55 = vld [vmem:[%s0 + $0xf8] sm:$0xff]
  %v56 = vld [vmem:[%s0 + $0x100] sm:$0xff]
  %v57 = vld [vmem:[%s0 + $0x108] sm:$0xff]
  %v58 = vld [vmem:[%s0 + $0x110] sm:$0xff]
  %v59 = vld [vmem:[%s0 + $0x118] sm:$0xff]
  %v60 = vld [vmem:[%s0 + $0x120] sm:$0xff]
  %v61 = vld [vmem:[%s0 + $0x128] sm:$0xff]
  %v62 = vld [vmem:[%s0 + $0x130] sm:$0xff]
  %v63 = vld [vmem:[%s0 + $0x138] sm:$0xff]
  %v64 = vld [vmem:[%s0 + $0x140] sm:$0xff]
  %v65 = vld [vmem:[%s0 + $0x148] sm:$0xff]
  %v66 = vld [vmem:[%s0 + $0x150] sm:$0xff]
  %v67 = vld [vmem:[%s0 + $0x158] sm:$0xff]
  %v68 = vld [vmem:[%s0 + $0x160] sm:$0xff]
  %v69 = vld [vmem:[%s0 + $0x168] sm:$0xff]
  %v70 = vld [vmem:[%s0 + $0x170] sm:$0xff]
  %v71 = vld [vmem:[%s0 + $0x178] sm:$0xff]
  %v72 = vld [vmem:[%s0 + $0x180] sm:$0xff]
  %v73 = vld [vmem:[%s0 + $0x188] sm:$0xff]
  %v74 = vld [vmem:[%s0 + $0x190] sm:$0xff]
  %v75 = vld [vmem:[%s0 + $0x198] sm:$0xff]
  %v76 = vld [vmem:[%s0 + $0x1a0] sm:$0xff]
  %v77 = vld [vmem:[%s0 + $0x1a8] sm:$0xff]
  %v78 = vld [vmem:[%s0 + $0x1b0] sm:$0xff]
  %v79 = vld [vmem:[%s0 + $0x1b8] sm:$0xff]
  %v80 = vld [vmem:[%s0 + $0x1c0] sm:$0xff]
  %v81 = vld [vmem:[%s0 + $0x1c8] sm:$0xff]
  %v82 = vld [vmem:[%s0 + $0x1d0] sm:$0xff]
  %v83 = vld [vmem:[%s0 + $0x1d8] sm:$0xff]
  %v84 = vld [vmem:[%s0 + $0x1e0] sm:$0xff]
  %v85 = vld [vmem:[%s0 + $0x1e8] sm:$0xff]
  %v86 = vld [vmem:[%s0 + $0x1f0] sm:$0xff]
  %v87 = vld [vmem:[%s0 + $0x1f8] sm:$0xff]
  %v88 = vperm.slane %v13, 0
  %vm89 = vcmask 130048
  %v91 = vsel %vm89, %v24, 0
  %v94 = vsel %vm89, %v25, 0
  %v97 = vsel %vm89, %v26, 0
  %v100 = vsel %vm89, %v27, 0
  %v103 = vsel %vm89, %v28, 0
  %v106 = vsel %vm89, %v29, 0
  %v109 = vsel %vm89, %v30, 0
  %v112 = vsel %vm89, %v31, 0
  %v115 = vsel %vm89, %v32, 0
  %v118 = vsel %vm89, %v33, 0
  %v121 = vsel %vm89, %v34, 0
  %v124 = vsel %vm89, %v35, 0
  %v127 = vsel %vm89, %v36, 0
  %v130 = vsel %vm89, %v37, 0
  %v133 = vsel %vm89, %v38, 0
  %v136 = vsel %vm89, %v39, 0
  %v139 = vsel %vm89, %v40, 0
  %v142 = vsel %vm89, %v41, 0
  %v145 = vsel %vm89, %v42, 0
  %v148 = vsel %vm89, %v43, 0
  %v151 = vsel %vm89, %v44, 0
  %v154 = vsel %vm89, %v45, 0
  %v157 = vsel %vm89, %v46, 0
  %v160 = vsel %vm89, %v47, 0
  %v163 = vsel %vm89, %v48, 0
  %v166 = vsel %vm89, %v49, 0
  %v169 = vsel %vm89, %v50, 0
  %v172 = vsel %vm89, %v51, 0
  %v175 = vsel %vm89, %v52, 0
  %v178 = vsel %vm89, %v53, 0
  %v181 = vsel %vm89, %v54, 0
  %v184 = vsel %vm89, %v55, 0
  %v187 = vsel %vm89, %v56, 0
  %v190 = vsel %vm89, %v57, 0
  %v193 = vsel %vm89, %v58, 0
  %v196 = vsel %vm89, %v59, 0
  %v199 = vsel %vm89, %v60, 0
  %v202 = vsel %vm89, %v61, 0
  %v205 = vsel %vm89, %v62, 0
  %v208 = vsel %vm89, %v63, 0
  %v211 = vsel %vm89, %v64, 0
  %v214 = vsel %vm89, %v65, 0
  %v217 = vsel %vm89, %v66, 0
  %v220 = vsel %vm89, %v67, 0
  %v223 = vsel %vm89, %v68, 0
  %v226 = vsel %vm89, %v69, 0
  %v229 = vsel %vm89, %v70, 0
  %v232 = vsel %vm89, %v71, 0
  %v235 = vsel %vm89, %v72, 0
  %v238 = vsel %vm89, %v73, 0
  %v241 = vsel %vm89, %v74, 0
  %v244 = vsel %vm89, %v75, 0
  %v247 = vsel %vm89, %v76, 0
  %v250 = vsel %vm89, %v77, 0
  %v253 = vsel %vm89, %v78, 0
  %v256 = vsel %vm89, %v79, 0
  %v259 = vsel %vm89, %v80, 0
  %v262 = vsel %vm89, %v81, 0
  %v265 = vsel %vm89, %v82, 0
  %v268 = vsel %vm89, %v83, 0
  %v271 = vsel %vm89, %v84, 0
  %v274 = vsel %vm89, %v85, 0
  %v277 = vsel %vm89, %v86, 0
  %v280 = vsel %vm89, %v87, 0
  %282 = vmatpush.msra.mxu0 0.0
  %283 = vmatpush.msra.mxu0 0.0
  %284 = vmatpush.msra.mxu0 0.0
  %285 = vmatpush.msra.mxu0 0.0
  %286 = vmatpush.msra.mxu0 0.0
  %287 = vmatpush.msra.mxu0 0.0
  %288 = vmatpush.msra.mxu0 0.0
  %289 = vmatpush.msra.mxu0 0.0
  %290 = vmatpush.msra.mxu0 0.0
  %291 = vmatpush.msra.mxu0 0.0
  %292 = vmatpush.msra.mxu0 0.0
  %293 = vmatpush.msra.mxu0 0.0
  %294 = vmatpush.msra.mxu0 0.0
  %295 = vmatpush.msra.mxu0 0.0
  %296 = vmatpush.msra.mxu0 %v12
  %297 = vmatpush.msra.mxu0 %v11
  %298 = vmatmul.f32.gmra.mxu0 %v91
  %v299 = vpop.f32.mrf.mxu0
  %v300 = vadd.f32 %v88, %v299
  %301 = vmatmul.f32.gmra.mxu0 %v94
  %v302 = vpop.f32.mrf.mxu0
  %v303 = vadd.f32 %v88, %v302
  %304 = vmatmul.f32.gmra.mxu0 %v97
  %v305 = vpop.f32.mrf.mxu0
  %v306 = vadd.f32 %v88, %v305
  %307 = vmatmul.f32.gmra.mxu0 %v100
  %v308 = vpop.f32.mrf.mxu0
  %v309 = vadd.f32 %v88, %v308
  %310 = vmatmul.f32.gmra.mxu0 %v103
  %v311 = vpop.f32.mrf.mxu0
  %v312 = vadd.f32 %v88, %v311
  %313 = vmatmul.f32.gmra.mxu0 %v106
  %v314 = vpop.f32.mrf.mxu0
  %v315 = vadd.f32 %v88, %v314
  %316 = vmatmul.f32.gmra.mxu0 %v109
  %v317 = vpop.f32.mrf.mxu0
  %v318 = vadd.f32 %v88, %v317
  %319 = vmatmul.f32.gmra.mxu0 %v112
  %v320 = vpop.f32.mrf.mxu0
  %v321 = vadd.f32 %v88, %v320
  %322 = vmatmul.f32.gmra.mxu0 %v115
  %v323 = vpop.f32.mrf.mxu0
  %v324 = vadd.f32 %v88, %v323
  %325 = vmatmul.f32.gmra.mxu0 %v118
  %v326 = vpop.f32.mrf.mxu0
  %v327 = vadd.f32 %v88, %v326
  %328 = vmatmul.f32.gmra.mxu0 %v121
  %v329 = vpop.f32.mrf.mxu0
  %v330 = vadd.f32 %v88, %v329
  %331 = vmatmul.f32.gmra.mxu0 %v124
  %v332 = vpop.f32.mrf.mxu0
  %v333 = vadd.f32 %v88, %v332
  %334 = vmatmul.f32.gmra.mxu0 %v127
  %v335 = vpop.f32.mrf.mxu0
  %v336 = vadd.f32 %v88, %v335
  %337 = vmatmul.f32.gmra.mxu0 %v130
  %v338 = vpop.f32.mrf.mxu0
  %v339 = vadd.f32 %v88, %v338
  %340 = vmatmul.f32.gmra.mxu0 %v133
  %v341 = vpop.f32.mrf.mxu0
  %v342 = vadd.f32 %v88, %v341
  %343 = vmatmul.f32.gmra.mxu0 %v136
  %v344 = vpop.f32.mrf.mxu0
  %v345 = vadd.f32 %v88, %v344
  %346 = vmatmul.f32.gmra.mxu0 %v139
  %v347 = vpop.f32.mrf.mxu0
  %v348 = vadd.f32 %v88, %v347
  %349 = vmatmul.f32.gmra.mxu0 %v142
  %v350 = vpop.f32.mrf.mxu0
  %v351 = vadd.f32 %v88, %v350
  %352 = vmatmul.f32.gmra.mxu0 %v145
  %v353 = vpop.f32.mrf.mxu0
  %v354 = vadd.f32 %v88, %v353
  %355 = vmatmul.f32.gmra.mxu0 %v148
  %v356 = vpop.f32.mrf.mxu0
  %v357 = vadd.f32 %v88, %v356
  %358 = vmatmul.f32.gmra.mxu0 %v151
  %v359 = vpop.f32.mrf.mxu0
  %v360 = vadd.f32 %v88, %v359
  %361 = vmatmul.f32.gmra.mxu0 %v154
  %v362 = vpop.f32.mrf.mxu0
  %v363 = vadd.f32 %v88, %v362
  %364 = vmatmul.f32.gmra.mxu0 %v157
  %v365 = vpop.f32.mrf.mxu0
  %v366 = vadd.f32 %v88, %v365
  %367 = vmatmul.f32.gmra.mxu0 %v160
  %v368 = vpop.f32.mrf.mxu0
  %v369 = vadd.f32 %v88, %v368
  %370 = vmatmul.f32.gmra.mxu0 %v163
  %v371 = vpop.f32.mrf.mxu0
  %v372 = vadd.f32 %v88, %v371
  %373 = vmatmul.f32.gmra.mxu0 %v166
  %v374 = vpop.f32.mrf.mxu0
  %v375 = vadd.f32 %v88, %v374
  %376 = vmatmul.f32.gmra.mxu0 %v169
  %v377 = vpop.f32.mrf.mxu0
  %v378 = vadd.f32 %v88, %v377
  %379 = vmatmul.f32.gmra.mxu0 %v172
  %v380 = vpop.f32.mrf.mxu0
  %v381 = vadd.f32 %v88, %v380
  %382 = vmatmul.f32.gmra.mxu0 %v175
  %v383 = vpop.f32.mrf.mxu0
  %v384 = vadd.f32 %v88, %v383
  %385 = vmatmul.f32.gmra.mxu0 %v178
  %v386 = vpop.f32.mrf.mxu0
  %v387 = vadd.f32 %v88, %v386
  %388 = vmatmul.f32.gmra.mxu0 %v181
  %v389 = vpop.f32.mrf.mxu0
  %v390 = vadd.f32 %v88, %v389
  %391 = vmatmul.f32.gmra.mxu0 %v184
  %v392 = vpop.f32.mrf.mxu0
  %v393 = vadd.f32 %v88, %v392
  %394 = vmatmul.f32.gmra.mxu0 %v187
  %v395 = vpop.f32.mrf.mxu0
  %v396 = vadd.f32 %v88, %v395
  %397 = vmatmul.f32.gmra.mxu0 %v190
  %v398 = vpop.f32.mrf.mxu0
  %v399 = vadd.f32 %v88, %v398
  %400 = vmatmul.f32.gmra.mxu0 %v193
  %v401 = vpop.f32.mrf.mxu0
  %v402 = vadd.f32 %v88, %v401
  %403 = vmatmul.f32.gmra.mxu0 %v196
  %v404 = vpop.f32.mrf.mxu0
  %v405 = vadd.f32 %v88, %v404
  %406 = vmatmul.f32.gmra.mxu0 %v199
  %v407 = vpop.f32.mrf.mxu0
  %v408 = vadd.f32 %v88, %v407
  %409 = vmatmul.f32.gmra.mxu0 %v202
  %v410 = vpop.f32.mrf.mxu0
  %v411 = vadd.f32 %v88, %v410
  %412 = vmatmul.f32.gmra.mxu0 %v205
  %v413 = vpop.f32.mrf.mxu0
  %v414 = vadd.f32 %v88, %v413
  %415 = vmatmul.f32.gmra.mxu0 %v208
  %v416 = vpop.f32.mrf.mxu0
  %v417 = vadd.f32 %v88, %v416
  %418 = vmatmul.f32.gmra.mxu0 %v211
  %v419 = vpop.f32.mrf.mxu0
  %v420 = vadd.f32 %v88, %v419
  %421 = vmatmul.f32.gmra.mxu0 %v214
  %v422 = vpop.f32.mrf.mxu0
  %v423 = vadd.f32 %v88, %v422
  %424 = vmatmul.f32.gmra.mxu0 %v217
  %v425 = vpop.f32.mrf.mxu0
  %v426 = vadd.f32 %v88, %v425
  %427 = vmatmul.f32.gmra.mxu0 %v220
  %v428 = vpop.f32.mrf.mxu0
  %v429 = vadd.f32 %v88, %v428
  %430 = vmatmul.f32.gmra.mxu0 %v223
  %v431 = vpop.f32.mrf.mxu0
  %v432 = vadd.f32 %v88, %v431
  %433 = vmatmul.f32.gmra.mxu0 %v226
  %v434 = vpop.f32.mrf.mxu0
  %v435 = vadd.f32 %v88, %v434
  %436 = vmatmul.f32.gmra.mxu0 %v229
  %v437 = vpop.f32.mrf.mxu0
  %v438 = vadd.f32 %v88, %v437
  %439 = vmatmul.f32.gmra.mxu0 %v232
  %v440 = vpop.f32.mrf.mxu0
  %v441 = vadd.f32 %v88, %v440
  %442 = vmatmul.f32.gmra.mxu0 %v235
  %v443 = vpop.f32.mrf.mxu0
  %v444 = vadd.f32 %v88, %v443
  %445 = vmatmul.f32.gmra.mxu0 %v238
  %v446 = vpop.f32.mrf.mxu0
  %v447 = vadd.f32 %v88, %v446
  %448 = vmatmul.f32.gmra.mxu0 %v241
  %v449 = vpop.f32.mrf.mxu0
  %v450 = vadd.f32 %v88, %v449
  %451 = vmatmul.f32.gmra.mxu0 %v244
  %v452 = vpop.f32.mrf.mxu0
  %v453 = vadd.f32 %v88, %v452
  %454 = vmatmul.f32.gmra.mxu0 %v247
  %v455 = vpop.f32.mrf.mxu0
  %v456 = vadd.f32 %v88, %v455
  %457 = vmatmul.f32.gmra.mxu0 %v250
  %v458 = vpop.f32.mrf.mxu0
  %v459 = vadd.f32 %v88, %v458
  %460 = vmatmul.f32.gmra.mxu0 %v253
  %v461 = vpop.f32.mrf.mxu0
  %v462 = vadd.f32 %v88, %v461
  %463 = vmatmul.f32.gmra.mxu0 %v256
  %v464 = vpop.f32.mrf.mxu0
  %v465 = vadd.f32 %v88, %v464
  %466 = vmatmul.f32.gmra.mxu0 %v259
  %v467 = vpop.f32.mrf.mxu0
  %v468 = vadd.f32 %v88, %v467
  %469 = vmatmul.f32.gmra.mxu0 %v262
  %v470 = vpop.f32.mrf.mxu0
  %v471 = vadd.f32 %v88, %v470
  %472 = vmatmul.f32.gmra.mxu0 %v265
  %v473 = vpop.f32.mrf.mxu0
  %v474 = vadd.f32 %v88, %v473
  %475 = vmatmul.f32.gmra.mxu0 %v268
  %v476 = vpop.f32.mrf.mxu0
  %v477 = vadd.f32 %v88, %v476
  %478 = vmatmul.f32.gmra.mxu0 %v271
  %v479 = vpop.f32.mrf.mxu0
  %v480 = vadd.f32 %v88, %v479
  %481 = vmatmul.f32.gmra.mxu0 %v274
  %v482 = vpop.f32.mrf.mxu0
  %v483 = vadd.f32 %v88, %v482
  %484 = vmatmul.f32.gmra.mxu0 %v277
  %v485 = vpop.f32.mrf.mxu0
  %v486 = vadd.f32 %v88, %v485
  %487 = vmatmul.f32.gmra.mxu0 %v280
  %v488 = vpop.f32.mrf.mxu0
  %v489 = vadd.f32 %v88, %v488
  %490 = vdwg.mxu0
  %v491 = vtanh.pop %v300
  %v492 = vtanh.pop %v303
  %v493 = vtanh.pop %v306
  %v494 = vtanh.pop %v309
  %v495 = vtanh.pop %v312
  %v496 = vtanh.pop %v315
  %v497 = vtanh.pop %v318
  %v498 = vtanh.pop %v321
  %v499 = vtanh.pop %v324
  %v500 = vtanh.pop %v327
  %v501 = vtanh.pop %v330
  %v502 = vtanh.pop %v333
  %v503 = vtanh.pop %v336
  %v504 = vtanh.pop %v339
  %v505 = vtanh.pop %v342
  %v506 = vtanh.pop %v345
  %v507 = vtanh.pop %v348
  %v508 = vtanh.pop %v351
  %v509 = vtanh.pop %v354
  %v510 = vtanh.pop %v357
  %v511 = vtanh.pop %v360
  %v512 = vtanh.pop %v363
  %v513 = vtanh.pop %v366
  %v514 = vtanh.pop %v369
  %v515 = vtanh.pop %v372
  %v516 = vtanh.pop %v375
  %v517 = vtanh.pop %v378
  %v518 = vtanh.pop %v381
  %v519 = vtanh.pop %v384
  %v520 = vtanh.pop %v387
  %v521 = vtanh.pop %v390
  %v522 = vtanh.pop %v393
  %v523 = vtanh.pop %v396
  %v524 = vtanh.pop %v399
  %v525 = vtanh.pop %v402
  %v526 = vtanh.pop %v405
  %v527 = vtanh.pop %v408
  %v528 = vtanh.pop %v411
  %v529 = vtanh.pop %v414
  %v530 = vtanh.pop %v417
  %v531 = vtanh.pop %v420
  %v532 = vtanh.pop %v423
  %v533 = vtanh.pop %v426
  %v534 = vtanh.pop %v429
  %v535 = vtanh.pop %v432
  %v536 = vtanh.pop %v435
  %v537 = vtanh.pop %v438
  %v538 = vtanh.pop %v441
  %v539 = vtanh.pop %v444
  %v540 = vtanh.pop %v447
  %v541 = vtanh.pop %v450
  %v542 = vtanh.pop %v453
  %v543 = vtanh.pop %v456
  %v544 = vtanh.pop %v459
  %v545 = vtanh.pop %v462
  %v546 = vtanh.pop %v465
  %v547 = vtanh.pop %v468
  %v548 = vtanh.pop %v471
  %v549 = vtanh.pop %v474
  %v550 = vtanh.pop %v477
  %v551 = vtanh.pop %v480
  %v552 = vtanh.pop %v483
  %v553 = vtanh.pop %v486
  %v554 = vtanh.pop %v489
  %v555 = vperm.slane %v18, 0
  %vm556 = vcmask 261120
  %v558 = vsel %vm556, %v491, 0
  %v561 = vsel %vm556, %v492, 0
  %v564 = vsel %vm556, %v493, 0
  %v567 = vsel %vm556, %v494, 0
  %v570 = vsel %vm556, %v495, 0
  %v573 = vsel %vm556, %v496, 0
  %v576 = vsel %vm556, %v497, 0
  %v579 = vsel %vm556, %v498, 0
  %v582 = vsel %vm556, %v499, 0
  %v585 = vsel %vm556, %v500, 0
  %v588 = vsel %vm556, %v501, 0
  %v591 = vsel %vm556, %v502, 0
  %v594 = vsel %vm556, %v503, 0
  %v597 = vsel %vm556, %v504, 0
  %v600 = vsel %vm556, %v505, 0
  %v603 = vsel %vm556, %v506, 0
  %v606 = vsel %vm556, %v507, 0
  %v609 = vsel %vm556, %v508, 0
  %v612 = vsel %vm556, %v509, 0
  %v615 = vsel %vm556, %v510, 0
  %v618 = vsel %vm556, %v511, 0
  %v621 = vsel %vm556, %v512, 0
  %v624 = vsel %vm556, %v513, 0
  %v627 = vsel %vm556, %v514, 0
  %v630 = vsel %vm556, %v515, 0
  %v633 = vsel %vm556, %v516, 0
  %v636 = vsel %vm556, %v517, 0
  %v639 = vsel %vm556, %v518, 0
  %v642 = vsel %vm556, %v519, 0
  %v645 = vsel %vm556, %v520, 0
  %v648 = vsel %vm556, %v521, 0
  %v651 = vsel %vm556, %v522, 0
  %v654 = vsel %vm556, %v523, 0
  %v657 = vsel %vm556, %v524, 0
  %v660 = vsel %vm556, %v525, 0
  %v663 = vsel %vm556, %v526, 0
  %v666 = vsel %vm556, %v527, 0
  %v669 = vsel %vm556, %v528, 0
  %v672 = vsel %vm556, %v529, 0
  %v675 = vsel %vm556, %v530, 0
  %v678 = vsel %vm556, %v531, 0
  %v681 = vsel %vm556, %v532, 0
  %v684 = vsel %vm556, %v533, 0
  %v687 = vsel %vm556, %v534, 0
  %v690 = vsel %vm556, %v535, 0
  %v693 = vsel %vm556, %v536, 0
  %v696 = vsel %vm556, %v537, 0
  %v699 = vsel %vm556, %v538, 0
  %v702 = vsel %vm556, %v539, 0
  %v705 = vsel %vm556, %v540, 0
  %v708 = vsel %vm556, %v541, 0
  %v711 = vsel %vm556, %v542, 0
  %v714 = vsel %vm556, %v543, 0
  %v717 = vsel %vm556, %v544, 0
  %v720 = vsel %vm556, %v545, 0
  %v723 = vsel %vm556, %v546, 0
  %v726 = vsel %vm556, %v547, 0
  %v729 = vsel %vm556, %v548, 0
  %v732 = vsel %vm556, %v549, 0
  %v735 = vsel %vm556, %v550, 0
  %v738 = vsel %vm556, %v551, 0
  %v741 = vsel %vm556, %v552, 0
  %v744 = vsel %vm556, %v553, 0
  %v747 = vsel %vm556, %v554, 0
  %749 = vmatpush.msra.mxu0 0.0
  %750 = vmatpush.msra.mxu0 0.0
  %751 = vmatpush.msra.mxu0 0.0
  %752 = vmatpush.msra.mxu0 0.0
  %753 = vmatpush.msra.mxu0 0.0
  %754 = vmatpush.msra.mxu0 0.0
  %755 = vmatpush.msra.mxu0 0.0
  %756 = vmatpush.msra.mxu0 0.0
  %757 = vmatpush.msra.mxu0 0.0
  %758 = vmatpush.msra.mxu0 0.0
  %759 = vmatpush.msra.mxu0 0.0
  %760 = vmatpush.msra.mxu0 0.0
  %761 = vmatpush.msra.mxu0 %v17
  %762 = vmatpush.msra.mxu0 %v16
  %763 = vmatpush.msra.mxu0 %v15
  %764 = vmatpush.msra.mxu0 %v14
  %765 = vmatmul.f32.gmra.mxu0 %v558
  %v766 = vpop.f32.mrf.mxu0
  %v767 = vadd.f32 %v555, %v766
  %768 = vmatmul.f32.gmra.mxu0 %v561
  %v769 = vpop.f32.mrf.mxu0
  %v770 = vadd.f32 %v555, %v769
  %771 = vmatmul.f32.gmra.mxu0 %v564
  %v772 = vpop.f32.mrf.mxu0
  %v773 = vadd.f32 %v555, %v772
  %774 = vmatmul.f32.gmra.mxu0 %v567
  %v775 = vpop.f32.mrf.mxu0
  %v776 = vadd.f32 %v555, %v775
  %777 = vmatmul.f32.gmra.mxu0 %v570
  %v778 = vpop.f32.mrf.mxu0
  %v779 = vadd.f32 %v555, %v778
  %780 = vmatmul.f32.gmra.mxu0 %v573
  %v781 = vpop.f32.mrf.mxu0
  %v782 = vadd.f32 %v555, %v781
  %783 = vmatmul.f32.gmra.mxu0 %v576
  %v784 = vpop.f32.mrf.mxu0
  %v785 = vadd.f32 %v555, %v784
  %786 = vmatmul.f32.gmra.mxu0 %v579
  %v787 = vpop.f32.mrf.mxu0
  %v788 = vadd.f32 %v555, %v787
  %789 = vmatmul.f32.gmra.mxu0 %v582
  %v790 = vpop.f32.mrf.mxu0
  %v791 = vadd.f32 %v555, %v790
  %792 = vmatmul.f32.gmra.mxu0 %v585
  %v793 = vpop.f32.mrf.mxu0
  %v794 = vadd.f32 %v555, %v793
  %795 = vmatmul.f32.gmra.mxu0 %v588
  %v796 = vpop.f32.mrf.mxu0
  %v797 = vadd.f32 %v555, %v796
  %798 = vmatmul.f32.gmra.mxu0 %v591
  %v799 = vpop.f32.mrf.mxu0
  %v800 = vadd.f32 %v555, %v799
  %801 = vmatmul.f32.gmra.mxu0 %v594
  %v802 = vpop.f32.mrf.mxu0
  %v803 = vadd.f32 %v555, %v802
  %804 = vmatmul.f32.gmra.mxu0 %v597
  %v805 = vpop.f32.mrf.mxu0
  %v806 = vadd.f32 %v555, %v805
  %807 = vmatmul.f32.gmra.mxu0 %v600
  %v808 = vpop.f32.mrf.mxu0
  %v809 = vadd.f32 %v555, %v808
  %810 = vmatmul.f32.gmra.mxu0 %v603
  %v811 = vpop.f32.mrf.mxu0
  %v812 = vadd.f32 %v555, %v811
  %813 = vmatmul.f32.gmra.mxu0 %v606
  %v814 = vpop.f32.mrf.mxu0
  %v815 = vadd.f32 %v555, %v814
  %816 = vmatmul.f32.gmra.mxu0 %v609
  %v817 = vpop.f32.mrf.mxu0
  %v818 = vadd.f32 %v555, %v817
  %819 = vmatmul.f32.gmra.mxu0 %v612
  %v820 = vpop.f32.mrf.mxu0
  %v821 = vadd.f32 %v555, %v820
  %822 = vmatmul.f32.gmra.mxu0 %v615
  %v823 = vpop.f32.mrf.mxu0
  %v824 = vadd.f32 %v555, %v823
  %825 = vmatmul.f32.gmra.mxu0 %v618
  %v826 = vpop.f32.mrf.mxu0
  %v827 = vadd.f32 %v555, %v826
  %828 = vmatmul.f32.gmra.mxu0 %v621
  %v829 = vpop.f32.mrf.mxu0
  %v830 = vadd.f32 %v555, %v829
  %831 = vmatmul.f32.gmra.mxu0 %v624
  %v832 = vpop.f32.mrf.mxu0
  %v833 = vadd.f32 %v555, %v832
  %834 = vmatmul.f32.gmra.mxu0 %v627
  %v835 = vpop.f32.mrf.mxu0
  %v836 = vadd.f32 %v555, %v835
  %837 = vmatmul.f32.gmra.mxu0 %v630
  %v838 = vpop.f32.mrf.mxu0
  %v839 = vadd.f32 %v555, %v838
  %840 = vmatmul.f32.gmra.mxu0 %v633
  %v841 = vpop.f32.mrf.mxu0
  %v842 = vadd.f32 %v555, %v841
  %843 = vmatmul.f32.gmra.mxu0 %v636
  %v844 = vpop.f32.mrf.mxu0
  %v845 = vadd.f32 %v555, %v844
  %846 = vmatmul.f32.gmra.mxu0 %v639
  %v847 = vpop.f32.mrf.mxu0
  %v848 = vadd.f32 %v555, %v847
  %849 = vmatmul.f32.gmra.mxu0 %v642
  %v850 = vpop.f32.mrf.mxu0
  %v851 = vadd.f32 %v555, %v850
  %852 = vmatmul.f32.gmra.mxu0 %v645
  %v853 = vpop.f32.mrf.mxu0
  %v854 = vadd.f32 %v555, %v853
  %855 = vmatmul.f32.gmra.mxu0 %v648
  %v856 = vpop.f32.mrf.mxu0
  %v857 = vadd.f32 %v555, %v856
  %858 = vmatmul.f32.gmra.mxu0 %v651
  %v859 = vpop.f32.mrf.mxu0
  %v860 = vadd.f32 %v555, %v859
  %861 = vmatmul.f32.gmra.mxu0 %v654
  %v862 = vpop.f32.mrf.mxu0
  %v863 = vadd.f32 %v555, %v862
  %864 = vmatmul.f32.gmra.mxu0 %v657
  %v865 = vpop.f32.mrf.mxu0
  %v866 = vadd.f32 %v555, %v865
  %867 = vmatmul.f32.gmra.mxu0 %v660
  %v868 = vpop.f32.mrf.mxu0
  %v869 = vadd.f32 %v555, %v868
  %870 = vmatmul.f32.gmra.mxu0 %v663
  %v871 = vpop.f32.mrf.mxu0
  %v872 = vadd.f32 %v555, %v871
  %873 = vmatmul.f32.gmra.mxu0 %v666
  %v874 = vpop.f32.mrf.mxu0
  %v875 = vadd.f32 %v555, %v874
  %876 = vmatmul.f32.gmra.mxu0 %v669
  %v877 = vpop.f32.mrf.mxu0
  %v878 = vadd.f32 %v555, %v877
  %879 = vmatmul.f32.gmra.mxu0 %v672
  %v880 = vpop.f32.mrf.mxu0
  %v881 = vadd.f32 %v555, %v880
  %882 = vmatmul.f32.gmra.mxu0 %v675
  %v883 = vpop.f32.mrf.mxu0
  %v884 = vadd.f32 %v555, %v883
  %885 = vmatmul.f32.gmra.mxu0 %v678
  %v886 = vpop.f32.mrf.mxu0
  %v887 = vadd.f32 %v555, %v886
  %888 = vmatmul.f32.gmra.mxu0 %v681
  %v889 = vpop.f32.mrf.mxu0
  %v890 = vadd.f32 %v555, %v889
  %891 = vmatmul.f32.gmra.mxu0 %v684
  %v892 = vpop.f32.mrf.mxu0
  %v893 = vadd.f32 %v555, %v892
  %894 = vmatmul.f32.gmra.mxu0 %v687
  %v895 = vpop.f32.mrf.mxu0
  %v896 = vadd.f32 %v555, %v895
  %897 = vmatmul.f32.gmra.mxu0 %v690
  %v898 = vpop.f32.mrf.mxu0
  %v899 = vadd.f32 %v555, %v898
  %900 = vmatmul.f32.gmra.mxu0 %v693
  %v901 = vpop.f32.mrf.mxu0
  %v902 = vadd.f32 %v555, %v901
  %903 = vmatmul.f32.gmra.mxu0 %v696
  %v904 = vpop.f32.mrf.mxu0
  %v905 = vadd.f32 %v555, %v904
  %906 = vmatmul.f32.gmra.mxu0 %v699
  %v907 = vpop.f32.mrf.mxu0
  %v908 = vadd.f32 %v555, %v907
  %909 = vmatmul.f32.gmra.mxu0 %v702
  %v910 = vpop.f32.mrf.mxu0
  %v911 = vadd.f32 %v555, %v910
  %912 = vmatmul.f32.gmra.mxu0 %v705
  %v913 = vpop.f32.mrf.mxu0
  %v914 = vadd.f32 %v555, %v913
  %915 = vmatmul.f32.gmra.mxu0 %v708
  %v916 = vpop.f32.mrf.mxu0
  %v917 = vadd.f32 %v555, %v916
  %918 = vmatmul.f32.gmra.mxu0 %v711
  %v919 = vpop.f32.mrf.mxu0
  %v920 = vadd.f32 %v555, %v919
  %921 = vmatmul.f32.gmra.mxu0 %v714
  %v922 = vpop.f32.mrf.mxu0
  %v923 = vadd.f32 %v555, %v922
  %924 = vmatmul.f32.gmra.mxu0 %v717
  %v925 = vpop.f32.mrf.mxu0
  %v926 = vadd.f32 %v555, %v925
  %927 = vmatmul.f32.gmra.mxu0 %v720
  %v928 = vpop.f32.mrf.mxu0
  %v929 = vadd.f32 %v555, %v928
  %930 = vmatmul.f32.gmra.mxu0 %v723
  %v931 = vpop.f32.mrf.mxu0
  %v932 = vadd.f32 %v555, %v931
  %933 = vmatmul.f32.gmra.mxu0 %v726
  %v934 = vpop.f32.mrf.mxu0
  %v935 = vadd.f32 %v555, %v934
  %936 = vmatmul.f32.gmra.mxu0 %v729
  %v937 = vpop.f32.mrf.mxu0
  %v938 = vadd.f32 %v555, %v937
  %939 = vmatmul.f32.gmra.mxu0 %v732
  %v940 = vpop.f32.mrf.mxu0
  %v941 = vadd.f32 %v555, %v940
  %942 = vmatmul.f32.gmra.mxu0 %v735
  %v943 = vpop.f32.mrf.mxu0
  %v944 = vadd.f32 %v555, %v943
  %945 = vmatmul.f32.gmra.mxu0 %v738
  %v946 = vpop.f32.mrf.mxu0
  %v947 = vadd.f32 %v555, %v946
  %948 = vmatmul.f32.gmra.mxu0 %v741
  %v949 = vpop.f32.mrf.mxu0
  %v950 = vadd.f32 %v555, %v949
  %951 = vmatmul.f32.gmra.mxu0 %v744
  %v952 = vpop.f32.mrf.mxu0
  %v953 = vadd.f32 %v555, %v952
  %954 = vmatmul.f32.gmra.mxu0 %v747
  %v955 = vpop.f32.mrf.mxu0
  %v956 = vadd.f32 %v555, %v955
  %957 = vdwg.mxu0
  %v958 = vtanh.pop %v767
  %v959 = vtanh.pop %v770
  %v960 = vtanh.pop %v773
  %v961 = vtanh.pop %v776
  %v962 = vtanh.pop %v779
  %v963 = vtanh.pop %v782
  %v964 = vtanh.pop %v785
  %v965 = vtanh.pop %v788
  %v966 = vtanh.pop %v791
  %v967 = vtanh.pop %v794
  %v968 = vtanh.pop %v797
  %v969 = vtanh.pop %v800
  %v970 = vtanh.pop %v803
  %v971 = vtanh.pop %v806
  %v972 = vtanh.pop %v809
  %v973 = vtanh.pop %v812
  %v974 = vtanh.pop %v815
  %v975 = vtanh.pop %v818
  %v976 = vtanh.pop %v821
  %v977 = vtanh.pop %v824
  %v978 = vtanh.pop %v827
  %v979 = vtanh.pop %v830
  %v980 = vtanh.pop %v833
  %v981 = vtanh.pop %v836
  %v982 = vtanh.pop %v839
  %v983 = vtanh.pop %v842
  %v984 = vtanh.pop %v845
  %v985 = vtanh.pop %v848
  %v986 = vtanh.pop %v851
  %v987 = vtanh.pop %v854
  %v988 = vtanh.pop %v857
  %v989 = vtanh.pop %v860
  %v990 = vtanh.pop %v863
  %v991 = vtanh.pop %v866
  %v992 = vtanh.pop %v869
  %v993 = vtanh.pop %v872
  %v994 = vtanh.pop %v875
  %v995 = vtanh.pop %v878
  %v996 = vtanh.pop %v881
  %v997 = vtanh.pop %v884
  %v998 = vtanh.pop %v887
  %v999 = vtanh.pop %v890
  %v1000 = vtanh.pop %v893
  %v1001 = vtanh.pop %v896
  %v1002 = vtanh.pop %v899
  %v1003 = vtanh.pop %v902
  %v1004 = vtanh.pop %v905
  %v1005 = vtanh.pop %v908
  %v1006 = vtanh.pop %v911
  %v1007 = vtanh.pop %v914
  %v1008 = vtanh.pop %v917
  %v1009 = vtanh.pop %v920
  %v1010 = vtanh.pop %v923
  %v1011 = vtanh.pop %v926
  %v1012 = vtanh.pop %v929
  %v1013 = vtanh.pop %v932
  %v1014 = vtanh.pop %v935
  %v1015 = vtanh.pop %v938
  %v1016 = vtanh.pop %v941
  %v1017 = vtanh.pop %v944
  %v1018 = vtanh.pop %v947
  %v1019 = vtanh.pop %v950
  %v1020 = vtanh.pop %v953
  %v1021 = vtanh.pop %v956
  %v1022 = vperm.slane %v23, 0
  %v1024 = vsel %vm556, %v958, 0
  %v1027 = vsel %vm556, %v959, 0
  %v1030 = vsel %vm556, %v960, 0
  %v1033 = vsel %vm556, %v961, 0
  %v1036 = vsel %vm556, %v962, 0
  %v1039 = vsel %vm556, %v963, 0
  %v1042 = vsel %vm556, %v964, 0
  %v1045 = vsel %vm556, %v965, 0
  %v1048 = vsel %vm556, %v966, 0
  %v1051 = vsel %vm556, %v967, 0
  %v1054 = vsel %vm556, %v968, 0
  %v1057 = vsel %vm556, %v969, 0
  %v1060 = vsel %vm556, %v970, 0
  %v1063 = vsel %vm556, %v971, 0
  %v1066 = vsel %vm556, %v972, 0
  %v1069 = vsel %vm556, %v973, 0
  %v1072 = vsel %vm556, %v974, 0
  %v1075 = vsel %vm556, %v975, 0
  %v1078 = vsel %vm556, %v976, 0
  %v1081 = vsel %vm556, %v977, 0
  %v1084 = vsel %vm556, %v978, 0
  %v1087 = vsel %vm556, %v979, 0
  %v1090 = vsel %vm556, %v980, 0
  %v1093 = vsel %vm556, %v981, 0
  %v1096 = vsel %vm556, %v982, 0
  %v1099 = vsel %vm556, %v983, 0
  %v1102 = vsel %vm556, %v984, 0
  %v1105 = vsel %vm556, %v985, 0
  %v1108 = vsel %vm556, %v986, 0
  %v1111 = vsel %vm556, %v987, 0
  %v1114 = vsel %vm556, %v988, 0
  %v1117 = vsel %vm556, %v989, 0
  %v1120 = vsel %vm556, %v990, 0
  %v1123 = vsel %vm556, %v991, 0
  %v1126 = vsel %vm556, %v992, 0
  %v1129 = vsel %vm556, %v993, 0
  %v1132 = vsel %vm556, %v994, 0
  %v1135 = vsel %vm556, %v995, 0
  %v1138 = vsel %vm556, %v996, 0
  %v1141 = vsel %vm556, %v997, 0
  %v1144 = vsel %vm556, %v998, 0
  %v1147 = vsel %vm556, %v999, 0
  %v1150 = vsel %vm556, %v1000, 0
  %v1153 = vsel %vm556, %v1001, 0
  %v1156 = vsel %vm556, %v1002, 0
  %v1159 = vsel %vm556, %v1003, 0
  %v1162 = vsel %vm556, %v1004, 0
  %v1165 = vsel %vm556, %v1005, 0
  %v1168 = vsel %vm556, %v1006, 0
  %v1171 = vsel %vm556, %v1007, 0
  %v1174 = vsel %vm556, %v1008, 0
  %v1177 = vsel %vm556, %v1009, 0
  %v1180 = vsel %vm556, %v1010, 0
  %v1183 = vsel %vm556, %v1011, 0
  %v1186 = vsel %vm556, %v1012, 0
  %v1189 = vsel %vm556, %v1013, 0
  %v1192 = vsel %vm556, %v1014, 0
  %v1195 = vsel %vm556, %v1015, 0
  %v1198 = vsel %vm556, %v1016, 0
  %v1201 = vsel %vm556, %v1017, 0
  %v1204 = vsel %vm556, %v1018, 0
  %v1207 = vsel %vm556, %v1019, 0
  %v1210 = vsel %vm556, %v1020, 0
  %v1213 = vsel %vm556, %v1021, 0
  %1215 = vmatpush.msra.mxu0 0.0
  %1216 = vmatpush.msra.mxu0 0.0
  %1217 = vmatpush.msra.mxu0 0.0
  %1218 = vmatpush.msra.mxu0 0.0
  %1219 = vmatpush.msra.mxu0 0.0
  %1220 = vmatpush.msra.mxu0 0.0
  %1221 = vmatpush.msra.mxu0 0.0
  %1222 = vmatpush.msra.mxu0 0.0
  %1223 = vmatpush.msra.mxu0 0.0
  %1224 = vmatpush.msra.mxu0 0.0
  %1225 = vmatpush.msra.mxu0 0.0
  %1226 = vmatpush.msra.mxu0 0.0
  %1227 = vmatpush.msra.mxu0 %v22
  %1228 = vmatpush.msra.mxu0 %v21
  %1229 = vmatpush.msra.mxu0 %v20
  %1230 = vmatpush.msra.mxu0 %v19
  %1231 = vmatmul.f32.gmra.mxu0 %v1024
  %v1232 = vpop.f32.mrf.mxu0
  %v1233 = vadd.f32 %v1022, %v1232
  %1234 = vmatmul.f32.gmra.mxu0 %v1027
  %v1235 = vpop.f32.mrf.mxu0
  %v1236 = vadd.f32 %v1022, %v1235
  %1237 = vmatmul.f32.gmra.mxu0 %v1030
  %v1238 = vpop.f32.mrf.mxu0
  %v1239 = vadd.f32 %v1022, %v1238
  %1240 = vmatmul.f32.gmra.mxu0 %v1033
  %v1241 = vpop.f32.mrf.mxu0
  %v1242 = vadd.f32 %v1022, %v1241
  %1243 = vmatmul.f32.gmra.mxu0 %v1036
  %v1244 = vpop.f32.mrf.mxu0
  %v1245 = vadd.f32 %v1022, %v1244
  %1246 = vmatmul.f32.gmra.mxu0 %v1039
  %v1247 = vpop.f32.mrf.mxu0
  %v1248 = vadd.f32 %v1022, %v1247
  %1249 = vmatmul.f32.gmra.mxu0 %v1042
  %v1250 = vpop.f32.mrf.mxu0
  %v1251 = vadd.f32 %v1022, %v1250
  %1252 = vmatmul.f32.gmra.mxu0 %v1045
  %v1253 = vpop.f32.mrf.mxu0
  %v1254 = vadd.f32 %v1022, %v1253
  %1255 = vmatmul.f32.gmra.mxu0 %v1048
  %v1256 = vpop.f32.mrf.mxu0
  %v1257 = vadd.f32 %v1022, %v1256
  %1258 = vmatmul.f32.gmra.mxu0 %v1051
  %v1259 = vpop.f32.mrf.mxu0
  %v1260 = vadd.f32 %v1022, %v1259
  %1261 = vmatmul.f32.gmra.mxu0 %v1054
  %v1262 = vpop.f32.mrf.mxu0
  %v1263 = vadd.f32 %v1022, %v1262
  %1264 = vmatmul.f32.gmra.mxu0 %v1057
  %v1265 = vpop.f32.mrf.mxu0
  %v1266 = vadd.f32 %v1022, %v1265
  %1267 = vmatmul.f32.gmra.mxu0 %v1060
  %v1268 = vpop.f32.mrf.mxu0
  %v1269 = vadd.f32 %v1022, %v1268
  %1270 = vmatmul.f32.gmra.mxu0 %v1063
  %v1271 = vpop.f32.mrf.mxu0
  %v1272 = vadd.f32 %v1022, %v1271
  %1273 = vmatmul.f32.gmra.mxu0 %v1066
  %v1274 = vpop.f32.mrf.mxu0
  %v1275 = vadd.f32 %v1022, %v1274
  %1276 = vmatmul.f32.gmra.mxu0 %v1069
  %v1277 = vpop.f32.mrf.mxu0
  %v1278 = vadd.f32 %v1022, %v1277
  %1279 = vmatmul.f32.gmra.mxu0 %v1072
  %v1280 = vpop.f32.mrf.mxu0
  %v1281 = vadd.f32 %v1022, %v1280
  %1282 = vmatmul.f32.gmra.mxu0 %v1075
  %v1283 = vpop.f32.mrf.mxu0
  %v1284 = vadd.f32 %v1022, %v1283
  %1285 = vmatmul.f32.gmra.mxu0 %v1078
  %v1286 = vpop.f32.mrf.mxu0
  %v1287 = vadd.f32 %v1022, %v1286
  %1288 = vmatmul.f32.gmra.mxu0 %v1081
  %v1289 = vpop.f32.mrf.mxu0
  %v1290 = vadd.f32 %v1022, %v1289
  %1291 = vmatmul.f32.gmra.mxu0 %v1084
  %v1292 = vpop.f32.mrf.mxu0
  %v1293 = vadd.f32 %v1022, %v1292
  %1294 = vmatmul.f32.gmra.mxu0 %v1087
  %v1295 = vpop.f32.mrf.mxu0
  %v1296 = vadd.f32 %v1022, %v1295
  %1297 = vmatmul.f32.gmra.mxu0 %v1090
  %v1298 = vpop.f32.mrf.mxu0
  %v1299 = vadd.f32 %v1022, %v1298
  %1300 = vmatmul.f32.gmra.mxu0 %v1093
  %v1301 = vpop.f32.mrf.mxu0
  %v1302 = vadd.f32 %v1022, %v1301
  %1303 = vmatmul.f32.gmra.mxu0 %v1096
  %v1304 = vpop.f32.mrf.mxu0
  %v1305 = vadd.f32 %v1022, %v1304
  %1306 = vmatmul.f32.gmra.mxu0 %v1099
  %v1307 = vpop.f32.mrf.mxu0
  %v1308 = vadd.f32 %v1022, %v1307
  %1309 = vmatmul.f32.gmra.mxu0 %v1102
  %v1310 = vpop.f32.mrf.mxu0
  %v1311 = vadd.f32 %v1022, %v1310
  %1312 = vmatmul.f32.gmra.mxu0 %v1105
  %v1313 = vpop.f32.mrf.mxu0
  %v1314 = vadd.f32 %v1022, %v1313
  %1315 = vmatmul.f32.gmra.mxu0 %v1108
  %v1316 = vpop.f32.mrf.mxu0
  %v1317 = vadd.f32 %v1022, %v1316
  %1318 = vmatmul.f32.gmra.mxu0 %v1111
  %v1319 = vpop.f32.mrf.mxu0
  %v1320 = vadd.f32 %v1022, %v1319
  %1321 = vmatmul.f32.gmra.mxu0 %v1114
  %v1322 = vpop.f32.mrf.mxu0
  %v1323 = vadd.f32 %v1022, %v1322
  %1324 = vmatmul.f32.gmra.mxu0 %v1117
  %v1325 = vpop.f32.mrf.mxu0
  %v1326 = vadd.f32 %v1022, %v1325
  %1327 = vmatmul.f32.gmra.mxu0 %v1120
  %v1328 = vpop.f32.mrf.mxu0
  %v1329 = vadd.f32 %v1022, %v1328
  %1330 = vmatmul.f32.gmra.mxu0 %v1123
  %v1331 = vpop.f32.mrf.mxu0
  %v1332 = vadd.f32 %v1022, %v1331
  %1333 = vmatmul.f32.gmra.mxu0 %v1126
  %v1334 = vpop.f32.mrf.mxu0
  %v1335 = vadd.f32 %v1022, %v1334
  %1336 = vmatmul.f32.gmra.mxu0 %v1129
  %v1337 = vpop.f32.mrf.mxu0
  %v1338 = vadd.f32 %v1022, %v1337
  %1339 = vmatmul.f32.gmra.mxu0 %v1132
  %v1340 = vpop.f32.mrf.mxu0
  %v1341 = vadd.f32 %v1022, %v1340
  %1342 = vmatmul.f32.gmra.mxu0 %v1135
  %v1343 = vpop.f32.mrf.mxu0
  %v1344 = vadd.f32 %v1022, %v1343
  %1345 = vmatmul.f32.gmra.mxu0 %v1138
  %v1346 = vpop.f32.mrf.mxu0
  %v1347 = vadd.f32 %v1022, %v1346
  %1348 = vmatmul.f32.gmra.mxu0 %v1141
  %v1349 = vpop.f32.mrf.mxu0
  %v1350 = vadd.f32 %v1022, %v1349
  %1351 = vmatmul.f32.gmra.mxu0 %v1144
  %v1352 = vpop.f32.mrf.mxu0
  %v1353 = vadd.f32 %v1022, %v1352
  %1354 = vmatmul.f32.gmra.mxu0 %v1147
  %v1355 = vpop.f32.mrf.mxu0
  %v1356 = vadd.f32 %v1022, %v1355
  %1357 = vmatmul.f32.gmra.mxu0 %v1150
  %v1358 = vpop.f32.mrf.mxu0
  %v1359 = vadd.f32 %v1022, %v1358
  %1360 = vmatmul.f32.gmra.mxu0 %v1153
  %v1361 = vpop.f32.mrf.mxu0
  %v1362 = vadd.f32 %v1022, %v1361
  %1363 = vmatmul.f32.gmra.mxu0 %v1156
  %v1364 = vpop.f32.mrf.mxu0
  %v1365 = vadd.f32 %v1022, %v1364
  %1366 = vmatmul.f32.gmra.mxu0 %v1159
  %v1367 = vpop.f32.mrf.mxu0
  %v1368 = vadd.f32 %v1022, %v1367
  %1369 = vmatmul.f32.gmra.mxu0 %v1162
  %v1370 = vpop.f32.mrf.mxu0
  %v1371 = vadd.f32 %v1022, %v1370
  %1372 = vmatmul.f32.gmra.mxu0 %v1165
  %v1373 = vpop.f32.mrf.mxu0
  %v1374 = vadd.f32 %v1022, %v1373
  %1375 = vmatmul.f32.gmra.mxu0 %v1168
  %v1376 = vpop.f32.mrf.mxu0
  %v1377 = vadd.f32 %v1022, %v1376
  %1378 = vmatmul.f32.gmra.mxu0 %v1171
  %v1379 = vpop.f32.mrf.mxu0
  %v1380 = vadd.f32 %v1022, %v1379
  %1381 = vmatmul.f32.gmra.mxu0 %v1174
  %v1382 = vpop.f32.mrf.mxu0
  %v1383 = vadd.f32 %v1022, %v1382
  %1384 = vmatmul.f32.gmra.mxu0 %v1177
  %v1385 = vpop.f32.mrf.mxu0
  %v1386 = vadd.f32 %v1022, %v1385
  %1387 = vmatmul.f32.gmra.mxu0 %v1180
  %v1388 = vpop.f32.mrf.mxu0
  %v1389 = vadd.f32 %v1022, %v1388
  %1390 = vmatmul.f32.gmra.mxu0 %v1183
  %v1391 = vpop.f32.mrf.mxu0
  %v1392 = vadd.f32 %v1022, %v1391
  %1393 = vmatmul.f32.gmra.mxu0 %v1186
  %v1394 = vpop.f32.mrf.mxu0
  %v1395 = vadd.f32 %v1022, %v1394
  %1396 = vmatmul.f32.gmra.mxu0 %v1189
  %v1397 = vpop.f32.mrf.mxu0
  %v1398 = vadd.f32 %v1022, %v1397
  %1399 = vmatmul.f32.gmra.mxu0 %v1192
  %v1400 = vpop.f32.mrf.mxu0
  %v1401 = vadd.f32 %v1022, %v1400
  %1402 = vmatmul.f32.gmra.mxu0 %v1195
  %v1403 = vpop.f32.mrf.mxu0
  %v1404 = vadd.f32 %v1022, %v1403
  %1405 = vmatmul.f32.gmra.mxu0 %v1198
  %v1406 = vpop.f32.mrf.mxu0
  %v1407 = vadd.f32 %v1022, %v1406
  %1408 = vmatmul.f32.gmra.mxu0 %v1201
  %v1409 = vpop.f32.mrf.mxu0
  %v1410 = vadd.f32 %v1022, %v1409
  %1411 = vmatmul.f32.gmra.mxu0 %v1204
  %v1412 = vpop.f32.mrf.mxu0
  %v1413 = vadd.f32 %v1022, %v1412
  %1414 = vmatmul.f32.gmra.mxu0 %v1207
  %v1415 = vpop.f32.mrf.mxu0
  %v1416 = vadd.f32 %v1022, %v1415
  %1417 = vmatmul.f32.gmra.mxu0 %v1210
  %v1418 = vpop.f32.mrf.mxu0
  %v1419 = vadd.f32 %v1022, %v1418
  %1420 = vmatmul.f32.gmra.mxu0 %v1213
  %v1421 = vpop.f32.mrf.mxu0
  %v1422 = vadd.f32 %v1022, %v1421
  %1423 = vdwg.mxu0
  %vm1424 = vcmask 31744
  %1425 = vst.msk [vmem:[%s2] sm:$0xff] %vm1424, %v1233
  %1426 = vst.msk [vmem:[%s2 + $0x8] sm:$0xff] %vm1424, %v1236
  %1427 = vst.msk [vmem:[%s2 + $0x10] sm:$0xff] %vm1424, %v1239
  %1428 = vst.msk [vmem:[%s2 + $0x18] sm:$0xff] %vm1424, %v1242
  %1429 = vst.msk [vmem:[%s2 + $0x20] sm:$0xff] %vm1424, %v1245
  %1430 = vst.msk [vmem:[%s2 + $0x28] sm:$0xff] %vm1424, %v1248
  %1431 = vst.msk [vmem:[%s2 + $0x30] sm:$0xff] %vm1424, %v1251
  %1432 = vst.msk [vmem:[%s2 + $0x38] sm:$0xff] %vm1424, %v1254
  %1433 = vst.msk [vmem:[%s2 + $0x40] sm:$0xff] %vm1424, %v1257
  %1434 = vst.msk [vmem:[%s2 + $0x48] sm:$0xff] %vm1424, %v1260
  %1435 = vst.msk [vmem:[%s2 + $0x50] sm:$0xff] %vm1424, %v1263
  %1436 = vst.msk [vmem:[%s2 + $0x58] sm:$0xff] %vm1424, %v1266
  %1437 = vst.msk [vmem:[%s2 + $0x60] sm:$0xff] %vm1424, %v1269
  %1438 = vst.msk [vmem:[%s2 + $0x68] sm:$0xff] %vm1424, %v1272
  %1439 = vst.msk [vmem:[%s2 + $0x70] sm:$0xff] %vm1424, %v1275
  %1440 = vst.msk [vmem:[%s2 + $0x78] sm:$0xff] %vm1424, %v1278
  %1441 = vst.msk [vmem:[%s2 + $0x80] sm:$0xff] %vm1424, %v1281
  %1442 = vst.msk [vmem:[%s2 + $0x88] sm:$0xff] %vm1424, %v1284
  %1443 = vst.msk [vmem:[%s2 + $0x90] sm:$0xff] %vm1424, %v1287
  %1444 = vst.msk [vmem:[%s2 + $0x98] sm:$0xff] %vm1424, %v1290
  %1445 = vst.msk [vmem:[%s2 + $0xa0] sm:$0xff] %vm1424, %v1293
  %1446 = vst.msk [vmem:[%s2 + $0xa8] sm:$0xff] %vm1424, %v1296
  %1447 = vst.msk [vmem:[%s2 + $0xb0] sm:$0xff] %vm1424, %v1299
  %1448 = vst.msk [vmem:[%s2 + $0xb8] sm:$0xff] %vm1424, %v1302
  %1449 = vst.msk [vmem:[%s2 + $0xc0] sm:$0xff] %vm1424, %v1305
  %1450 = vst.msk [vmem:[%s2 + $0xc8] sm:$0xff] %vm1424, %v1308
  %1451 = vst.msk [vmem:[%s2 + $0xd0] sm:$0xff] %vm1424, %v1311
  %1452 = vst.msk [vmem:[%s2 + $0xd8] sm:$0xff] %vm1424, %v1314
  %1453 = vst.msk [vmem:[%s2 + $0xe0] sm:$0xff] %vm1424, %v1317
  %1454 = vst.msk [vmem:[%s2 + $0xe8] sm:$0xff] %vm1424, %v1320
  %1455 = vst.msk [vmem:[%s2 + $0xf0] sm:$0xff] %vm1424, %v1323
  %1456 = vst.msk [vmem:[%s2 + $0xf8] sm:$0xff] %vm1424, %v1326
  %1457 = vst.msk [vmem:[%s2 + $0x100] sm:$0xff] %vm1424, %v1329
  %1458 = vst.msk [vmem:[%s2 + $0x108] sm:$0xff] %vm1424, %v1332
  %1459 = vst.msk [vmem:[%s2 + $0x110] sm:$0xff] %vm1424, %v1335
  %1460 = vst.msk [vmem:[%s2 + $0x118] sm:$0xff] %vm1424, %v1338
  %1461 = vst.msk [vmem:[%s2 + $0x120] sm:$0xff] %vm1424, %v1341
  %1462 = vst.msk [vmem:[%s2 + $0x128] sm:$0xff] %vm1424, %v1344
  %1463 = vst.msk [vmem:[%s2 + $0x130] sm:$0xff] %vm1424, %v1347
  %1464 = vst.msk [vmem:[%s2 + $0x138] sm:$0xff] %vm1424, %v1350
  %1465 = vst.msk [vmem:[%s2 + $0x140] sm:$0xff] %vm1424, %v1353
  %1466 = vst.msk [vmem:[%s2 + $0x148] sm:$0xff] %vm1424, %v1356
  %1467 = vst.msk [vmem:[%s2 + $0x150] sm:$0xff] %vm1424, %v1359
  %1468 = vst.msk [vmem:[%s2 + $0x158] sm:$0xff] %vm1424, %v1362
  %1469 = vst.msk [vmem:[%s2 + $0x160] sm:$0xff] %vm1424, %v1365
  %1470 = vst.msk [vmem:[%s2 + $0x168] sm:$0xff] %vm1424, %v1368
  %1471 = vst.msk [vmem:[%s2 + $0x170] sm:$0xff] %vm1424, %v1371
  %1472 = vst.msk [vmem:[%s2 + $0x178] sm:$0xff] %vm1424, %v1374
  %1473 = vst.msk [vmem:[%s2 + $0x180] sm:$0xff] %vm1424, %v1377
  %1474 = vst.msk [vmem:[%s2 + $0x188] sm:$0xff] %vm1424, %v1380
  %1475 = vst.msk [vmem:[%s2 + $0x190] sm:$0xff] %vm1424, %v1383
  %1476 = vst.msk [vmem:[%s2 + $0x198] sm:$0xff] %vm1424, %v1386
  %1477 = vst.msk [vmem:[%s2 + $0x1a0] sm:$0xff] %vm1424, %v1389
  %1478 = vst.msk [vmem:[%s2 + $0x1a8] sm:$0xff] %vm1424, %v1392
  %1479 = vst.msk [vmem:[%s2 + $0x1b0] sm:$0xff] %vm1424, %v1395
  %1480 = vst.msk [vmem:[%s2 + $0x1b8] sm:$0xff] %vm1424, %v1398
  %1481 = vst.msk [vmem:[%s2 + $0x1c0] sm:$0xff] %vm1424, %v1401
  %1482 = vst.msk [vmem:[%s2 + $0x1c8] sm:$0xff] %vm1424, %v1404
  %1483 = vst.msk [vmem:[%s2 + $0x1d0] sm:$0xff] %vm1424, %v1407
  %1484 = vst.msk [vmem:[%s2 + $0x1d8] sm:$0xff] %vm1424, %v1410
  %1485 = vst.msk [vmem:[%s2 + $0x1e0] sm:$0xff] %vm1424, %v1413
  %1486 = vst.msk [vmem:[%s2 + $0x1e8] sm:$0xff] %vm1424, %v1416
  %1487 = vst.msk [vmem:[%s2 + $0x1f0] sm:$0xff] %vm1424, %v1419
  %1488 = vst.msk [vmem:[%s2 + $0x1f8] sm:$0xff] %vm1424, %v1422
  // Predicated region
  $region10: #{_lambda_.1} parent=0 // pred_check
    _
  $region11: #{_lambda_.1} parent=0 // pred_check_branch
    %1490 = sbr.rel (0) target = $region13
  $region12: #{_lambda_.1} parent=0 // pred_region
    _
  $region13: #{_lambda_.1} parent=0 // pred_fallthru
    _
  // Predicated region
  $region14: #{_lambda_.1} parent=0 // pred_check
    _
  $region15: #{_lambda_.1} parent=0 // pred_check_branch
    %1492 = sbr.rel (0) target = $region17
  $region16: #{_lambda_.1} parent=0 // pred_region
    _
  $region17: #{_lambda_.1} parent=0 // pred_fallthru
    _

</llo_original>
